<compile_context>
chip_gen: v7x
topology: tpu7x:2x2x1
jax: 0.10.0
libtpu: 0.0.40
codegen_flags: <defaults>
</compile_context>

<pallas_src>
import jax
import jax.numpy as jnp
from jax import lax
from jax.experimental import pallas as pl
from jax.experimental.pallas import tpu as pltpu

IN_FEATURES = 10
OUT_FEATURES = 1

_LANE = 128
_LANE_CHUNK = 2048     # inner-loop sub-chunk (bounds accumulator vreg pressure)
_MAX_TILE_B = 16384    # multiple of _LANE_CHUNK; ~0.7 MiB/block of VMEM
_PALLAS_MIN_B = 4096   # below this, plain XLA matmul wins


def _cdiv(a, b):
    return (a + b - 1) // b


def _pick_tile_b(b_rows):
    """Lane tile over batch: big enough to amortize grid-step overhead, small
    enough that n_blocks >= 4 when possible (v7x 2-TC 'parallel' occupancy)."""
    lane_groups = _cdiv(b_rows, _LANE)
    tile = _LANE * max(1, _cdiv(lane_groups, 4))
    if tile > _LANE_CHUNK:
        # Keep the tile a multiple of the inner chunk so the kernel loop is exact.
        tile = _LANE_CHUNK * _cdiv(tile, _LANE_CHUNK)
    return min(_MAX_TILE_B, tile)


def _linear_kernel(x_ref, w_ref, b_ref, o_ref):
    # x_ref: (IN_FEATURES, TILE_B) VMEM   -- batch on the lane axis
    # w_ref: (IN_FEATURES, 1)      VMEM   -- weight column, broadcast along lanes
    # b_ref: (1,)                  SMEM   -- scalar bias
    # o_ref: (1, TILE_B)           VMEM   -- lane-dense output slab
    tile_b = o_ref.shape[-1]
    chunk = min(_LANE_CHUNK, tile_b)
    n_chunks = tile_b // chunk

    w_col = w_ref[...]          # (10, 1), hoisted out of the loop
    bias = b_ref[0]

    def body(c, carry):
        start = pl.multiple_of(c * chunk, _LANE)
        xc = x_ref[:, pl.ds(start, chunk)]                       # (10, chunk)
        # VPU multiply + XLU sublane reduce; MXU stays idle (as intended).
        yc = jnp.sum(xc * w_col, axis=0, keepdims=True) + bias   # (1, chunk)
        o_ref[:, pl.ds(start, chunk)] = yc.astype(o_ref.dtype)
        return carry

    lax.fori_loop(0, n_chunks, body, 0, unroll=True)


def _linear_pallas_feature_major(x_t, weight, bias):
    """x_t: (IN_FEATURES, B) f32 feature-major. Returns (1, B).

    This is the 'hoisted' production entry point: if the producer stores x
    feature-major, no extra HBM transpose pass is needed at all."""
    b_rows = x_t.shape[1]
    tile_b = _pick_tile_b(b_rows)
    n_blocks = _cdiv(b_rows, tile_b)
    b_padded = n_blocks * tile_b
    if b_padded != b_rows:
        x_t = jnp.pad(x_t, ((0, 0), (0, b_padded - b_rows)))

    w_col = weight.reshape(IN_FEATURES, OUT_FEATURES).astype(jnp.float32)
    b_flat = bias.reshape(OUT_FEATURES).astype(jnp.float32)

    out_t = pl.pallas_call(
        _linear_kernel,
        out_shape=jax.ShapeDtypeStruct((OUT_FEATURES, b_padded), x_t.dtype),
        grid_spec=pl.GridSpec(
            grid=(n_blocks,),
            in_specs=[
                pl.BlockSpec((IN_FEATURES, tile_b), lambda i: (0, i)),
                pl.BlockSpec((IN_FEATURES, OUT_FEATURES), lambda i: (0, 0)),
                pl.BlockSpec(memory_space=pltpu.MemorySpace.SMEM),
            ],
            out_specs=pl.BlockSpec((OUT_FEATURES, tile_b), lambda i: (0, i)),
        ),
        compiler_params=pltpu.CompilerParams(
            dimension_semantics=("parallel",),
        ),
        cost_estimate=pl.CostEstimate(
            flops=2 * b_padded * IN_FEATURES,
            transcendentals=0,
            bytes_accessed=(IN_FEATURES + OUT_FEATURES) * b_padded * 4
                           + (IN_FEATURES + OUT_FEATURES) * 4,
        ),
    )(x_t, w_col, b_flat)
    return out_t[:, :b_rows]


def simple_model_forward(x, weight, bias, *, force_pallas=False):
    """SimpleModel.forward: y = x @ weight.T + bias.

    x: (B, 10) f32, weight: (1, 10) f32 (PyTorch layout), bias: (1,) f32.
    """
    B = x.shape[0]
    if B < _PALLAS_MIN_B and not force_pallas:
        # Small batches: pallas_call fixed cost + layout glue exceeds the matmul.
        return x @ weight.T + bias

    # TODO(synk): produce/store x feature-major (10, B) upstream so this transpose
    # (an extra full HBM pass over x) disappears; then call
    # _linear_pallas_feature_major directly.
    x_t = x.astype(jnp.float32).T
    out_t = _linear_pallas_feature_major(x_t, weight, bias)
    return out_t.T.astype(x.dtype)  # (B, 1)


if __name__ == "__main__":
    key = jax.random.PRNGKey(0)
    kx, kw, kb = jax.random.split(key, 3)

    B = 8
    x = jax.random.normal(kx, (B, IN_FEATURES), dtype=jnp.float32)
    # Deterministic parameter init (mimics nn.Linear uniform(-1/sqrt(in), 1/sqrt(in))).
    bound = 1.0 / (IN_FEATURES ** 0.5)
    weight = jax.random.uniform(
        kw, (OUT_FEATURES, IN_FEATURES), minval=-bound, maxval=bound,
        dtype=jnp.float32)
    bias = jax.random.uniform(
        kb, (OUT_FEATURES,), minval=-bound, maxval=bound, dtype=jnp.float32)

    y_ref = x @ weight.T + bias

    # Dispatch path (small B -> plain XLA matmul, as the review requested).
    y = simple_model_forward(x, weight, bias)
    jax.block_until_ready(y)
    assert y.shape == (B, OUT_FEATURES)
    assert jnp.allclose(y, y_ref, atol=1e-5, rtol=1e-5)

    # Exercise the Pallas kernel itself (forced), still at a small shape.
    y_k = simple_model_forward(x, weight, bias, force_pallas=True)
    jax.block_until_ready(y_k)
    assert y_k.shape == (B, OUT_FEATURES)
    assert jnp.allclose(y_k, y_ref, atol=1e-5, rtol=1e-5)

    print("KERNEL_OK")
</pallas_src>

<mosaic_0001>
module attributes {stable_mosaic.version = 11 : i64} {
  func.func @_linear_kernel(%arg0: i32, %arg1: memref<10x128xf32, #tpu.memory_space<vmem>>, %arg2: memref<10x1xf32, #tpu.memory_space<vmem>>, %arg3: memref<1xf32, #tpu.memory_space<smem>>, %arg4: memref<1x128xf32, #tpu.memory_space<vmem>>) attributes {dimension_semantics = [#tpu.dimension_semantics<parallel>], iteration_bounds = array<i64: 1>, scalar_prefetch = 0 : i64, scratch_operands = 0 : i64, tpu.core_type = #tpu.core_type<tc>, window_params = [{transform_indices = @transform_0, window_bounds = array<i64: 10, 128>}, {pipeline_mode = #tpu.pipeline_mode<synchronous>, transform_indices = @transform_1, window_bounds = array<i64: 10, 1>}, {transform_indices = @transform_2, window_bounds = array<i64: 1>}, {transform_indices = @transform_3, window_bounds = array<i64: 1, 128>}]} {
    %c0 = arith.constant 0 : index
    %c0_0 = arith.constant 0 : index
    %0 = vector.load %arg2[%c0, %c0_0] : memref<10x1xf32, #tpu.memory_space<vmem>>, vector<10x1xf32>
    %c0_1 = arith.constant 0 : index
    %1 = memref.load %arg3[%c0_1] : memref<1xf32, #tpu.memory_space<smem>>
    %c0_i32 = arith.constant 0 : i32
    %c128_i32 = arith.constant 128 : i32
    %2 = arith.muli %c0_i32, %c128_i32 : i32
    %3 = tpu.assume_multiple %2, 128 : i32
    %c0_2 = arith.constant 0 : index
    %4 = arith.index_cast %3 : i32 to index
    %5 = vector.load %arg1[%c0_2, %4] : memref<10x128xf32, #tpu.memory_space<vmem>>, vector<10x128xf32>
    %6 = vector.broadcast %0 : vector<10x1xf32> to vector<10x128xf32>
    %7 = arith.mulf %5, %6 : vector<10x128xf32>
    %cst = arith.constant dense<0.000000e+00> : vector<128xf32>
    %8 = vector.multi_reduction <add>, %7, %cst [0] : vector<10x128xf32> to vector<128xf32>
    %9 = vector.shape_cast %8 : vector<128xf32> to vector<1x128xf32>
    %10 = vector.broadcast %1 : f32 to vector<1x128xf32>
    %11 = arith.addf %9, %10 : vector<1x128xf32>
    %c0_3 = arith.constant 0 : index
    %12 = arith.index_cast %3 : i32 to index
    %13 = vector.load %arg4[%c0_3, %12] : memref<1x128xf32, #tpu.memory_space<vmem>>, vector<1x128xf32>
    tpu.vector_store %arg4[%c0_3, %12], %11 {strides = array<i32>} : memref<1x128xf32, #tpu.memory_space<vmem>>, vector<1x128xf32>,
    %c1_i32 = arith.constant 1 : i32
    return
  }
  func.func @transform_0(%arg0: i32) -> (i32, i32) {
    %c0_i32 = arith.constant 0 : i32
    %c0_i32_0 = arith.constant 0 : i32
    return %c0_i32, %arg0 : i32, i32
  }
  func.func @transform_1(%arg0: i32) -> (i32, i32) {
    %c0_i32 = arith.constant 0 : i32
    %c0_i32_0 = arith.constant 0 : i32
    %c0_i32_1 = arith.constant 0 : i32
    return %c0_i32, %c0_i32_0 : i32, i32
  }
  func.func @transform_2(%arg0: i32) -> i32 {
    %c0_i32 = arith.constant 0 : i32
    %c0_i32_0 = arith.constant 0 : i32
    return %c0_i32 : i32
  }
  func.func @transform_3(%arg0: i32) -> (i32, i32) {
    %c0_i32 = arith.constant 0 : i32
    %c0_i32_0 = arith.constant 0 : i32
    return %c0_i32, %arg0 : i32, i32
  }
}

</mosaic_0001>

<llo_original>
// kernel: tpu_custom_call.1
$region0: #{tpu_custom_call.1}
  #allocation0 [shape = 'u32[]', space=smem, size = 0x4, offset = 0x4, fixed_abs, tag = 'smem constant byte address 0x4 - core index']
  #allocation1 [shape = 'u32[144,128]{1,0:T(1,128)}', space=vmem, size = 0x12000, scoped, tag = 'internal scratch']
  #allocation2 [shape = 'f32[1]{0:T(128)S(6)}', space=smem, size = 0x200, scoped, tag = 'scoped memory for tpu_custom_call.1']
  %s0 = inlined_call_operand.vmem [shape: f32[10,128], index: 0, kind: input, shape index: {}]
  %s1 = inlined_call_operand.vmem [shape: f32[10,1], index: 1, kind: input, shape index: {}]
  %s2 = inlined_call_operand.<no memory space> [shape: f32[1], index: 2, kind: input, shape index: {}]
  %s3 = inlined_call_operand.hbm [shape: f32[1,128], index: 3, kind: output, shape index: {}]
  %s4 = sld [smem:[#allocation0]]
  $region22: #{tpu_custom_call.1} parent=0
    _
  %s6 = ssub.s32 1, %s4
  %s7 = scalar_select 0, %s6, %s4
  %8 = sst [smem:[#allocation2]] %s2
  $region1: #{tpu_custom_call.1} parent=0
    #allocation3 [shape = 'u8[512]{0}', space=vmem, size = 0x400, scoped, tag = 'output window, operand 0, single buffered']
    #allocation4 [shape = 's32[1]{0}', space=sflag, size = 0x4, scoped, tag = 'scoped memory for tpu_custom_call.1']
    %9 = vsyncpa [#allocation4], 0
    // Predicated region
    $region2: #{tpu_custom_call.1} parent=1 // pred_check
      _
    $region3: #{tpu_custom_call.1} parent=1 // pred_check_branch
      %11 = sbr.rel (0) target = $region5
    $region4: #{tpu_custom_call.1} parent=1 // pred_region
      _
    $region5: #{tpu_custom_call.1} parent=1 // pred_fallthru
      _
    // Predicated region
    $region6: #{tpu_custom_call.1} parent=1 // pred_check
      _
    $region7: #{tpu_custom_call.1} parent=1 // pred_check_branch
      %13 = sbr.rel (0) target = $region9
    $region8: #{tpu_custom_call.1} parent=1 // pred_region
      _
    $region9: #{tpu_custom_call.1} parent=1 // pred_fallthru
      _
    // Predicated region
    $region10: #{tpu_custom_call.1} parent=1 // pred_check
      _
    $region11: #{tpu_custom_call.1} parent=1 // pred_check_branch
      %15 = sbr.rel (0) target = $region13
    $region12: #{tpu_custom_call.1} parent=1 // pred_region
      _
    $region13: #{tpu_custom_call.1} parent=1 // pred_fallthru
      _
    %v16 = vld [vmem:[%s1] sm:$0xff]
    %v17 = vld [vmem:[%s1 + $0x8] sm:$0x3]
    %s18 = sld [smem:[#allocation2]]
    %v19 = vld [vmem:[%s0] sm:$0xff]
    %v20 = vld [vmem:[%s0 + $0x8] sm:$0x3]
    %22 = vset.pattern.permute.xlu0 0
    %23 = vperm.xlu0 %22, %v16
    %v24 = vpop.permute.xlu0 %23
    %27 = vset.pattern.permute.xlu0 0
    %28 = vperm.xlu0 %27, %v17
    %v29 = vpop.permute.xlu0 %28
    %v31 = vmul.f32 %v19, %v24
    %v32 = vmul.f32 %v20, %v29
    %vm33 = vcmask 1041408
    %v34 = vsel %vm33, %v32, 0.0
    %v35 = vadd.f32 %v31, %v34
    %v36 = vrot.slane %v35, 4
    %v37 = vadd.f32 %v35, %v36
    %v38 = vrot.slane %v37, 2
    %v39 = vadd.f32 %v37, %v38
    %v40 = vrot.slane %v39, 1
    %v41 = vadd.f32 %v39, %v40
    %v42 = vstv %s18
    %v43 = vadd.f32 %v41, %v42
    %44 = vst [vmem:[#allocation3] sm:$0x1] %v43
    // Predicated region
    $region14: #{tpu_custom_call.1} parent=1 // pred_check
      _
    $region15: #{tpu_custom_call.1} parent=1 // pred_check_branch
      %46 = sbr.rel (0) target = $region17
    $region16: #{tpu_custom_call.1} parent=1 // pred_region
      %s48 = ssub.s32 16, 16
      %49 = vsyncadd [#allocation4], %s48
      %s51 = sshll.u32 [#allocation3], 4
      %s52 = int_to_ptr.vmem [resolvable:$true] %s51
      %54 = dma.vmem_to_hbm [thread:$0]  %s52, 16, %s3, [#allocation4]
    $region17: #{tpu_custom_call.1} parent=1 // pred_fallthru
      _
    // Predicated region
    $region18: #{tpu_custom_call.1} parent=1 // pred_check
      _
    $region19: #{tpu_custom_call.1} parent=1 // pred_check_branch
      %56 = sbr.rel (0) target = $region21
    $region20: #{tpu_custom_call.1} parent=1 // pred_region
      %57 = dma.done [#allocation4], 16
    $region21: #{tpu_custom_call.1} parent=1 // pred_fallthru
      _
    %58 = vsyncpa [#allocation4], 1

</llo_original>
